<compile_context>
chip_gen: v7x
topology: tpu7x:2x2x1
jax: 0.10.0
libtpu: 0.0.40
codegen_flags: <defaults>
</compile_context>

<pallas_src>
import math

import jax
import jax.numpy as jnp
from jax.experimental import pallas as pl
from jax.experimental.pallas import tpu as pltpu

_LANES = 128
_SUBLANES = 8
_MAX_LANE_WIDTH = 4096            # widest lane-dense slab column searched for
_TARGET_TILE_BYTES = 4 << 20      # ~4 MiB/tile/array; 4x double-buffered = 16 MiB (fits v7x 64 MiB VMEM)
_VMEM_LIMIT_BYTES = 32 << 20      # explicit headroom over default scoped limits


def _copy_kernel(x_ref, o_ref):
    # Identity copy of the current lane-dense tile.
    o_ref[...] = x_ref[...]


def _choose_slab(n, itemsize):
    """Pick a (rows, cols) slab and per-block row count for a flat array of n elems."""
    # cols: largest multiple-of-128 divisor of n, capped -> lane-dense out_spec.
    cols = _LANES
    c = _MAX_LANE_WIDTH
    while c >= _LANES:
        if n % c == 0:
            cols = c
            break
        c -= _LANES
    rows = n // cols

    # block rows: target ~_TARGET_TILE_BYTES per tile, multiple of 8 sublanes.
    target_rows = max(
        _SUBLANES,
        (_TARGET_TILE_BYTES // (cols * itemsize)) // _SUBLANES * _SUBLANES,
    )
    block_rows = min(rows, target_rows)

    # v7x megacore: prefer >=2 grid steps so both TensorCores stream data.
    if block_rows == rows and rows >= 2 * _SUBLANES:
        block_rows = max(_SUBLANES, ((rows // 2) // _SUBLANES) * _SUBLANES)
    return rows, cols, block_rows


def _pallas_copy_flat(flat):
    """Stream-copy a 1D, 128-aligned array through a lane-dense Pallas kernel."""
    n = flat.shape[0]
    itemsize = jnp.dtype(flat.dtype).itemsize
    rows, cols, block_rows = _choose_slab(n, itemsize)

    x2d = flat.reshape(rows, cols)            # metadata-only (row-major)
    grid = (pl.cdiv(rows, block_rows),)

    out2d = pl.pallas_call(
        _copy_kernel,
        out_shape=jax.ShapeDtypeStruct((rows, cols), x2d.dtype),
        grid_spec=pltpu.PrefetchScalarGridSpec(
            num_scalar_prefetch=0,
            grid=grid,
            in_specs=[pl.BlockSpec((block_rows, cols), lambda i: (i, 0))],
            out_specs=pl.BlockSpec((block_rows, cols), lambda i: (i, 0)),
        ),
        compiler_params=pltpu.CompilerParams(
            dimension_semantics=("parallel",),
            vmem_limit_bytes=_VMEM_LIMIT_BYTES,
        ),
    )(x2d)

    return out2d.reshape(-1)                  # metadata-only


def _resolve_shape(total, shape):
    """Resolve a torch.view-style shape (at most one -1 allowed)."""
    shape = tuple(int(s) for s in shape)
    if shape.count(-1) > 1:
        raise ValueError("only one dimension can be -1")
    if -1 in shape:
        known = 1
        for s in shape:
            if s != -1:
                known *= s
        if known == 0 or total % known != 0:
            raise ValueError(f"cannot view size {total} as {shape}")
        shape = tuple(total // known if s == -1 else s for s in shape)
    if math.prod(shape) != total:
        raise ValueError(f"cannot view size {total} as {shape}")
    return shape


class View:
    """JAX/Pallas equivalent of the PyTorch View module."""

    def __init__(self, *shape):
        self.shape = shape

    def __call__(self, x):
        total = math.prod(x.shape) if x.ndim > 0 else 1
        target = _resolve_shape(total, self.shape)
        flat = x.reshape(-1)                  # metadata-only (contiguous, row-major)
        if total > 0 and total % _LANES == 0:
            flat = _pallas_copy_flat(flat)
        # TODO(synk): ragged (non-128-multiple) sizes fall back to the pure
        # metadata reshape; a masked pltpu.store tail tile could cover them too.
        return flat.reshape(target)


if __name__ == "__main__":
    key = jax.random.PRNGKey(0)
    # Small NCHW-like input consistent with the module's docstring examples.
    x = jax.random.normal(key, (2, 4, 16, 16), dtype=jnp.float32)

    # View(-1)
    y1 = View(-1)(x)
    jax.block_until_ready(y1)
    assert y1.shape == (2 * 4 * 16 * 16,)
    assert jnp.allclose(y1, x.reshape(-1))

    # View(2, -1)
    y2 = View(2, -1)(x)
    jax.block_until_ready(y2)
    assert y2.shape == (2, 4 * 16 * 16)
    assert jnp.allclose(y2, x.reshape(2, -1))

    # View(8, 16, 16) applied to the flattened tensor
    y3 = View(8, 16, 16)(y1)
    jax.block_until_ready(y3)
    assert y3.shape == (8, 16, 16)
    assert jnp.allclose(y3, x.reshape(8, 16, 16))

    print("KERNEL_OK")
</pallas_src>

<mosaic_0001>
module attributes {stable_mosaic.version = 11 : i64} {
  func.func @_copy_kernel(%arg0: i32, %arg1: memref<1x2048xf32, #tpu.memory_space<vmem>>, %arg2: memref<1x2048xf32, #tpu.memory_space<vmem>>) attributes {dimension_semantics = [#tpu.dimension_semantics<parallel>], iteration_bounds = array<i64: 1>, scalar_prefetch = 0 : i64, scratch_operands = 0 : i64, tpu.core_type = #tpu.core_type<tc>, window_params = [{transform_indices = @transform_0, window_bounds = array<i64: 1, 2048>}, {transform_indices = @transform_1, window_bounds = array<i64: 1, 2048>}]} {
    %c0 = arith.constant 0 : index
    %c0_0 = arith.constant 0 : index
    %0 = vector.load %arg1[%c0, %c0_0] : memref<1x2048xf32, #tpu.memory_space<vmem>>, vector<1x2048xf32>
    %c0_1 = arith.constant 0 : index
    %c0_2 = arith.constant 0 : index
    %1 = vector.load %arg2[%c0_1, %c0_2] : memref<1x2048xf32, #tpu.memory_space<vmem>>, vector<1x2048xf32>
    tpu.vector_store %arg2[%c0_1, %c0_2], %0 {strides = array<i32>} : memref<1x2048xf32, #tpu.memory_space<vmem>>, vector<1x2048xf32>,
    return
  }
  func.func @transform_0(%arg0: i32) -> (i32, i32) {
    %c0_i32 = arith.constant 0 : i32
    %c0_i32_0 = arith.constant 0 : i32
    return %arg0, %c0_i32 : i32, i32
  }
  func.func @transform_1(%arg0: i32) -> (i32, i32) {
    %c0_i32 = arith.constant 0 : i32
    %c0_i32_0 = arith.constant 0 : i32
    return %arg0, %c0_i32 : i32, i32
  }
}

</mosaic_0001>

<llo_original>
// kernel: tpu_custom_call.1
$region0: #{tpu_custom_call.1}
  #allocation0 [shape = 'u32[]', space=smem, size = 0x4, offset = 0x4, fixed_abs, tag = 'smem constant byte address 0x4 - core index']
  #allocation1 [shape = 'u32[144,128]{1,0:T(1,128)}', space=vmem, size = 0x12000, scoped, tag = 'internal scratch']
  %s0 = inlined_call_operand.hbm [shape: f32[1,2048], index: 0, kind: input, shape index: {}]
  %s1 = inlined_call_operand.hbm [shape: f32[1,2048], index: 1, kind: output, shape index: {}]
  %s2 = sld [smem:[#allocation0]]
  $region18: #{tpu_custom_call.1} parent=0
    _
  %s4 = ssub.s32 1, %s2
  %s5 = scalar_select 0, %s4, %s2
  $region1: #{tpu_custom_call.1} parent=0
    #allocation2 [shape = 'u8[8192]{0}', space=vmem, size = 0x2000, scoped, tag = 'input window, operand 0, single buffered']
    #allocation3 [shape = 's32[1]{0}', space=sflag, size = 0x4, scoped, tag = 'scoped memory for tpu_custom_call.1']
    #allocation4 [shape = 's32[1]{0}', space=sflag, size = 0x4, scoped, tag = 'scoped memory for tpu_custom_call.1']
    #allocation5 [shape = 'u8[8192]{0}', space=vmem, size = 0x2000, scoped, tag = 'output window, operand 0, single buffered']
    %6 = vsyncpa [#allocation3], 0
    %7 = vsyncpa [#allocation4], 0
    // Predicated region
    $region2: #{tpu_custom_call.1} parent=1 // pred_check
      _
    $region3: #{tpu_custom_call.1} parent=1 // pred_check_branch
      %9 = sbr.rel (0) target = $region5
    $region4: #{tpu_custom_call.1} parent=1 // pred_region
      %s11 = ssub.s32 256, 256
      %12 = vsyncadd [#allocation3], %s11
      %s14 = sshll.u32 [#allocation2], 4
      %s15 = int_to_ptr.vmem [resolvable:$true] %s14
      %17 = dma.hbm_to_vmem [thread:$0]  %s0, 256, %s15, [#allocation3]
    $region5: #{tpu_custom_call.1} parent=1 // pred_fallthru
      _
    // Predicated region
    $region6: #{tpu_custom_call.1} parent=1 // pred_check
      _
    $region7: #{tpu_custom_call.1} parent=1 // pred_check_branch
      %19 = sbr.rel (0) target = $region9
    $region8: #{tpu_custom_call.1} parent=1 // pred_region
      %20 = dma.done [#allocation3], 256
    $region9: #{tpu_custom_call.1} parent=1 // pred_fallthru
      _
    %v21 = vld [vmem:[#allocation2] sm:$0xff]
    %v22 = vld [vmem:[#allocation2 + $0x8] sm:$0xff]
    %23 = vst [vmem:[#allocation5] sm:$0xff] %v21
    %24 = vst [vmem:[#allocation5 + $0x8] sm:$0xff] %v22
    // Predicated region
    $region10: #{tpu_custom_call.1} parent=1 // pred_check
      _
    $region11: #{tpu_custom_call.1} parent=1 // pred_check_branch
      %26 = sbr.rel (0) target = $region13
    $region12: #{tpu_custom_call.1} parent=1 // pred_region
      %s28 = ssub.s32 256, 256
      %29 = vsyncadd [#allocation4], %s28
      %s31 = sshll.u32 [#allocation5], 4
      %s32 = int_to_ptr.vmem [resolvable:$true] %s31
      %34 = dma.vmem_to_hbm [thread:$0]  %s32, 256, %s1, [#allocation4]
    $region13: #{tpu_custom_call.1} parent=1 // pred_fallthru
      _
    // Predicated region
    $region14: #{tpu_custom_call.1} parent=1 // pred_check
      _
    $region15: #{tpu_custom_call.1} parent=1 // pred_check_branch
      %36 = sbr.rel (0) target = $region17
    $region16: #{tpu_custom_call.1} parent=1 // pred_region
      %37 = dma.done [#allocation4], 256
    $region17: #{tpu_custom_call.1} parent=1 // pred_fallthru
      _
    %38 = vsyncpa [#allocation3], 1
    %39 = vsyncpa [#allocation4], 1

</llo_original>
